<compile_context>
chip_gen: v7x
topology: tpu7x:2x2x1
jax: 0.10.0
libtpu: 0.0.40
codegen_flags: <defaults>
</compile_context>

<pallas_src>
import jax
import jax.numpy as jnp
from jax.experimental import pallas as pl
from jax.experimental.pallas import tpu as pltpu

H = 32          # hidden_dim
E = 4           # num_experts
EH = E * H      # 128 — lane-dense packed width
K_ACT = 2       # num_activated
OUT_DIM = 1
LN_EPS = 1e-5
EQ_EPS = 1e-6
GUMBEL_TAU = 1.0
VMEM_LIMIT = 32 * 1024 * 1024

MOE_PARAMS = ("w1big", "w2big", "wvbd", "repbig", "expand", "folds", "mavg", "vecp")


# ---------------------------------------------------------------- kernel utils
def _silu(x):
    # tanh-form SiLU: one EUP op per element (exp+reciprocal needs two)
    return x * (0.5 * (1.0 + jnp.tanh(0.5 * x)))


def _bf(x):
    return x.astype(jnp.bfloat16)


def _full_spec(shape):
    nd = len(shape)
    return pl.BlockSpec(shape, lambda i, nd=nd: (0,) * nd)


def _choose_tiling(n, max_tile=256):
    """Row tile (multiple of 8) and padded row count.  Prefers a grid >= 2 (and even)
    so both v7x TensorCores get work.  max_tile is sweepable (256/512/1024)."""
    if n <= 8:
        return 8, 8
    tn = min(max_tile, pl.cdiv(n, 2))
    tn = max(8, pl.cdiv(tn, 8) * 8)
    grid = pl.cdiv(n, tn)
    if grid % 2 == 1 and (grid + 1) * tn <= n + max(tn, n // 4):
        grid += 1
    return tn, grid * tn


# ------------------------------------------------------- router_v (gram) kernel
def _router_v_kernel(xv_ref, linbig_ref, repbig_ref, ssum3_ref, b_ref, out_ref):
    xv = xv_ref[...]                                                 # (tn, 128) f32
    xv_bf = _bf(xv)
    # t[:, k*EH + e*H + j] = sum_i v_k[:, i] * W_e[i, j]   (one wide bf16 matmul)
    t = jnp.dot(xv_bf, linbig_ref[...], preferred_element_type=jnp.float32)    # (tn, 384)
    # r[:, k*EH + e*H + j] = v_k[:, j]  (lane replication done on the MXU, no concat)
    r = jnp.dot(xv_bf, repbig_ref[...], preferred_element_type=jnp.float32)    # (tn, 384)
    acc = r * t
    out_ref[...] = (jnp.dot(acc, ssum3_ref[...], preferred_element_type=jnp.float32)
                    + b_ref[...])


def router_v_logits(xv, params, tn, n_pad):
    n = xv.shape[0]
    xv_p = jnp.pad(xv, ((0, n_pad - n), (0, 0)))
    out = pl.pallas_call(
        _router_v_kernel,
        grid=(n_pad // tn,),
        in_specs=[pl.BlockSpec((tn, EH), lambda i: (i, 0)),
                  _full_spec(params["linbig"].shape),
                  _full_spec(params["repbig"].shape),
                  _full_spec(params["ssum3"].shape),
                  _full_spec(params["lin_b"].shape)],
        out_specs=pl.BlockSpec((tn, E), lambda i: (i, 0)),
        out_shape=jax.ShapeDtypeStruct((n_pad, E), jnp.float32),
        compiler_params=pltpu.CompilerParams(
            dimension_semantics=("parallel",),
            vmem_limit_bytes=VMEM_LIMIT),
    )(xv_p, params["linbig"], params["repbig"], params["ssum3"], params["lin_b"])
    return out[:n]


# ------------------------------------------------------------------ MoE kernel
def _moe_kernel(xv_ref, mw_ref,
                w1_ref, w2_ref, wv_ref, rep_ref, expand_ref, folds_ref,
                mavg_ref, vecp_ref, out_ref):
    xv = xv_ref[...]                                                 # (tn, 128) f32
    xv_bf = _bf(xv)
    mavg = mavg_ref[...]                                             # (128,128) block-diag 1/H

    # ---- 8 expert first layers (4 x + 4 v-gate) in ONE bf16 matmul, then SiLU
    f1 = _silu(jnp.dot(xv_bf, w1_ref[...], preferred_element_type=jnp.float32)
               + vecp_ref[0:1, :])                                   # (tn, 256)
    # ---- 8 second layers: ONE block-diagonal (256,256) bf16 matmul, then SiLU
    f2 = _silu(jnp.dot(_bf(f1), w2_ref[...], preferred_element_type=jnp.float32)
               + vecp_ref[1:2, :])                                   # (tn, 256)
    h = f2[:, 0:EH]                                                  # x-expert hidden
    g = f2[:, EH:2 * EH]                                             # v-gate hidden

    # ---- per-expert LayerNorm on x path (chunk stats via block-diag mean matmul, f32)
    mu = jnp.dot(h, mavg, preferred_element_type=jnp.float32)
    hc = h - mu
    var = jnp.dot(hc * hc, mavg, preferred_element_type=jnp.float32)
    exx = hc * jax.lax.rsqrt(var + LN_EPS) * vecp_ref[2:3, 0:EH] + vecp_ref[3:4, 0:EH]

    # ---- per-expert vector gates (Linear, no bias)
    w = jnp.dot(_bf(g), wv_ref[...], preferred_element_type=jnp.float32)     # (tn, 128)

    # ---- replicate the 3 Cartesian components across the 4 expert chunks (MXU)
    rep = jnp.dot(xv_bf, rep_ref[...], preferred_element_type=jnp.float32)   # (tn, 384)
    r0 = rep[:, 0:EH]
    r1 = rep[:, EH:2 * EH]
    r2 = rep[:, 2 * EH:3 * EH]

    # ---- per-expert EquivariantLayerNorm on the gated vectors
    # TODO(synk): exact EquivariantLayerNorm definition not in the provided source;
    #             using v * gamma * rsqrt(mean_H(sum_c v_c^2) + eps).
    n2 = (w * w) * (r0 * r0 + r1 * r1 + r2 * r2)
    inv_e = jax.lax.rsqrt(jnp.dot(n2, mavg, preferred_element_type=jnp.float32) + EQ_EPS)
    base = vecp_ref[2:3, EH:2 * EH] * inv_e * w                      # gvln * inv * gate

    # ---- expert combine on the MXU: expand routing weights (tn,8)->(tn,512),
    #      mask lane-dense, fold back to the 128-lane output slab (permute scramble
    #      baked into the fold constants).
    mwe = jnp.dot(mw_ref[...], expand_ref[...], preferred_element_type=jnp.float32)
    d0 = mwe[:, 0:EH] * exx
    d1 = mwe[:, EH:2 * EH] * base * r0
    d2 = mwe[:, 2 * EH:3 * EH] * base * r1
    d3 = mwe[:, 3 * EH:4 * EH] * base * r2
    comb = (jnp.dot(_bf(d0), folds_ref[0:EH, :], preferred_element_type=jnp.float32)
            + jnp.dot(_bf(d1), folds_ref[EH:2 * EH, :], preferred_element_type=jnp.float32)
            + jnp.dot(_bf(d2), folds_ref[2 * EH:3 * EH, :], preferred_element_type=jnp.float32)
            + jnp.dot(_bf(d3), folds_ref[3 * EH:4 * EH, :], preferred_element_type=jnp.float32))

    # ---- residual + final norms on the full 128-lane slab (single unmasked store):
    #      LayerNorm_2 over x lanes, EquivariantLayerNorm_2 over v lanes.
    res = comb + xv
    maskx = vecp_ref[6:7, 0:EH]
    maskv = vecp_ref[7:8, 0:EH]
    mu_x = jnp.sum(res * maskx, axis=-1, keepdims=True) * (1.0 / H)
    xc = (res - mu_x) * maskx
    var_x = jnp.sum(xc * xc, axis=-1, keepdims=True) * (1.0 / H)
    inv_x = jax.lax.rsqrt(var_x + LN_EPS)
    vsq = jnp.sum(res * res * maskv, axis=-1, keepdims=True) * (1.0 / H)
    inv_v = jax.lax.rsqrt(vsq + EQ_EPS)
    scale = inv_x * maskx + inv_v * maskv
    out_ref[...] = ((res - mu_x * maskx) * scale * vecp_ref[4:5, 0:EH]
                    + vecp_ref[5:6, 0:EH])


def moe_combine(xv, mw, params, tn, n_pad):
    n = xv.shape[0]
    xv_p = jnp.pad(xv, ((0, n_pad - n), (0, 0)))
    mw_p = jnp.pad(mw, ((0, n_pad - n), (0, 0)))
    p_args = [params[k] for k in MOE_PARAMS]
    in_specs = ([pl.BlockSpec((tn, EH), lambda i: (i, 0)),
                 pl.BlockSpec((tn, 2 * E), lambda i: (i, 0))]
                + [_full_spec(a.shape) for a in p_args])
    out = pl.pallas_call(
        _moe_kernel,
        grid=(n_pad // tn,),
        in_specs=in_specs,
        out_specs=pl.BlockSpec((tn, EH), lambda i: (i, 0)),
        out_shape=jax.ShapeDtypeStruct((n_pad, EH), jnp.float32),
        compiler_params=pltpu.CompilerParams(
            dimension_semantics=("parallel",),
            vmem_limit_bytes=VMEM_LIMIT),
    )(xv_p, mw_p, *p_args)
    return out[:n]


# ------------------------------------------------------------------ JAX glue
def gumbel_softmax(key, logits, tau):
    e = jax.random.exponential(key, logits.shape, dtype=logits.dtype)
    g = -jnp.log(e)
    return jax.nn.softmax((logits + g) / tau, axis=-1)


def gumbel_route(key, score):
    k1, k2 = jax.random.split(key)
    return jax.nn.sigmoid(score + gumbel_softmax(k1, score, GUMBEL_TAU)
                          - gumbel_softmax(k2, score, GUMBEL_TAU))


def topk_mask_weights(logits, k):
    vals, idx = jax.lax.top_k(logits, k)
    rw = jax.nn.softmax(vals, axis=1)
    onehot = jax.nn.one_hot(idx, E, dtype=logits.dtype)
    mask = onehot.sum(axis=1)
    weights = (onehot * rw[..., None]).sum(axis=1)
    return mask * weights


def gcn_conv_sparse(x, src, dst, w, b, num_nodes):
    """GCNConv(H, E): X @ W precomputed once, symmetric-normalized sparse aggregation
    (O(num_edges) instead of an O(N^2) dense adjacency matmul)."""
    xw = x @ w                                                       # (N, E)
    idx = jnp.arange(num_nodes)
    s = jnp.concatenate([src, idx])
    d = jnp.concatenate([dst, idx])                                  # self loops
    deg = jax.ops.segment_sum(jnp.ones_like(d, dtype=x.dtype), d, num_segments=num_nodes)
    dinv = jax.lax.rsqrt(deg)
    coeff = (dinv[s] * dinv[d])[:, None]
    return jax.ops.segment_sum(xw[s] * coeff, d, num_segments=num_nodes) + b


def segment_mean(x, seg, num_segments):
    s = jax.ops.segment_sum(x, seg, num_segments=num_segments)
    c = jax.ops.segment_sum(jnp.ones((x.shape[0], 1), x.dtype), seg,
                            num_segments=num_segments)
    return s / jnp.maximum(c, 1.0)


def dssnet_forward(params, emb_x, emb_v, edge_src, edge_dst, batch, mol_idx,
                   num_graphs, num_mols, key):
    """One DSSNetV2 block (num_blocks=1), full MoE path (upcycling & epoch >= upcycling_epochs)."""
    # TODO(synk): conf/topo encoders, CrossAttention and norm_layers over the (external)
    # encoder block outputs are not reproducible here — emb_x / emb_v stand in for the
    # post-norm_layers embeddings fed to moe_block().
    n = emb_x.shape[0]
    xv = jnp.concatenate([emb_x, emb_v.reshape(n, 3 * H)], axis=1)   # (N, 4H) lane-dense slab
    tn, n_pad = _choose_tiling(n)

    # router_x: GCNConv in plain JAX (sparse); router_v: gram router Pallas kernel
    gcn_out = gcn_conv_sparse(emb_x, edge_src, edge_dst,
                              params["gcn_wt"], params["gcn_b"], n)
    linv_out = router_v_logits(xv, params, tn, n_pad)

    kx, kv = jax.random.split(key)
    logits_x = gumbel_route(kx, jax.nn.softmax(gcn_out, axis=1))
    logits_v = gumbel_route(kv, jax.nn.softmax(linv_out, axis=1))

    mw = jnp.concatenate([topk_mask_weights(logits_x, K_ACT),
                          topk_mask_weights(logits_v, K_ACT)], axis=1)   # (N, 8)

    out_slab = moe_combine(xv, mw, params, tn, n_pad)
    moe_x = out_slab[:, :H]
    moe_v = out_slab[:, H:].reshape(n, 3, H)

    scores = jax.nn.softmax(jnp.concatenate([logits_x, logits_v], axis=1), axis=1)

    # head: postprocess() is encoder-specific (external); replaced by per-graph mean
    # pooling of the MoE scalar output, global_mean_pool over molecules, sigmoid(Linear).
    graph_feat = segment_mean(moe_x, batch, num_graphs)
    mol_feat = segment_mean(graph_feat, mol_idx, num_mols)
    outs = jax.nn.sigmoid(mol_feat @ params["head_wt"] + params["head_b"]).squeeze(-1)

    z = jnp.log(jnp.sum(jnp.exp(scores), axis=1))
    z_graph = jax.ops.segment_sum(z, batch, num_segments=num_graphs)
    z_loss = jax.ops.segment_sum(z_graph, mol_idx, num_segments=num_mols)

    return outs, z_loss, moe_x, moe_v


# ------------------------------------------------------------------ params
def _pack_lastdim(w):
    """(E, H_in, H_out) per-expert (in,out) weights -> (H_in, E*H_out)."""
    e, hin, hout = w.shape
    return jnp.transpose(w, (1, 0, 2)).reshape(hin, e * hout)


def _block_diag(w):
    """(M, H_in, H_out) per-block (in,out) weights -> (M*H_in, M*H_out) block diagonal."""
    m, hin, hout = w.shape
    bd = jnp.zeros((m * hin, m * hout), w.dtype)
    for i in range(m):
        bd = bd.at[i * hin:(i + 1) * hin, i * hout:(i + 1) * hout].set(w[i])
    return bd


def init_params(key):
    ks = jax.random.split(key, 16)
    it = iter(ks)

    def nrm(shape, scale):
        return (scale * jax.random.normal(next(it), shape)).astype(jnp.float32)

    # per-expert weights stored (in, out)
    wx1 = nrm((E, H, H), 0.1); bx1 = nrm((E, H), 0.1)
    wx2 = nrm((E, H, H), 0.1); bx2 = nrm((E, H), 0.1)
    glnx = jnp.ones((E, H), jnp.float32); blnx = jnp.zeros((E, H), jnp.float32)
    wv1 = nrm((E, H, H), 0.1); bv1 = nrm((E, H), 0.1)
    wv2 = nrm((E, H, H), 0.1); bv2 = nrm((E, H), 0.1)
    wv = nrm((E, H, H), 0.1)
    gvln = jnp.ones((E, H), jnp.float32)
    g2 = jnp.ones((H,), jnp.float32); b2 = jnp.zeros((H,), jnp.float32)
    g2v = jnp.ones((H,), jnp.float32)

    p = {}
    eye = jnp.eye(H, dtype=jnp.float32)

    # fused first layers: (EH, 2EH) with only rows 0:H nonzero ([wx1 packed | wv1 packed])
    w1big = jnp.zeros((EH, 2 * EH), jnp.float32)
    w1big = w1big.at[0:H, 0:EH].set(_pack_lastdim(wx1))
    w1big = w1big.at[0:H, EH:2 * EH].set(_pack_lastdim(wv1))
    p["w1big"] = w1big.astype(jnp.bfloat16)
    # fused second layers: block-diagonal with blocks [wx2[0..3], wv2[0..3]]
    p["w2big"] = _block_diag(jnp.concatenate([wx2, wv2], axis=0)).astype(jnp.bfloat16)
    p["wvbd"] = _block_diag(wv).astype(jnp.bfloat16)

    # replication constant: rep[(k+1)*H + j, k*EH + e*H + j] = 1
    rep = jnp.zeros((EH, 3 * EH), jnp.float32)
    for k in range(3):
        for e in range(E):
            rep = rep.at[(k + 1) * H:(k + 2) * H,
                         k * EH + e * H:k * EH + (e + 1) * H].set(eye)
    p["repbig"] = rep.astype(jnp.bfloat16)

    # routing-weight expansion (8, 4*EH): mwx rows 0:4, mwv rows 4:8 with the
    # (4k+e)//3 column selection of the reference scramble
    exp = jnp.zeros((2 * E, 4 * EH), jnp.float32)
    ones = jnp.ones((H,), jnp.float32)
    for e in range(E):
        exp = exp.at[e, e * H:(e + 1) * H].set(ones)
    for k in range(3):
        for e in range(E):
            m = E * k + e
            exp = exp.at[E + m // 3,
                         (k + 1) * EH + e * H:(k + 1) * EH + (e + 1) * H].set(ones)
    p["expand"] = exp

    # fold constants (4*EH, EH): x combine -> lanes 0:H, v combine -> component (4k+e)%3
    fld = jnp.zeros((4 * EH, EH), jnp.float32)
    for e in range(E):
        fld = fld.at[e * H:(e + 1) * H, 0:H].set(eye)
    for k in range(3):
        for e in range(E):
            c = (E * k + e) % 3 + 1
            fld = fld.at[(k + 1) * EH + e * H:(k + 1) * EH + (e + 1) * H,
                         c * H:(c + 1) * H].set(eye)
    p["folds"] = fld.astype(jnp.bfloat16)

    cid = jnp.arange(EH) // H
    p["mavg"] = (cid[:, None] == cid[None, :]).astype(jnp.float32) / H

    # packed bias / gain / mask rows (8, 2*EH)
    maskx = jnp.concatenate([jnp.ones((H,), jnp.float32), jnp.zeros((3 * H,), jnp.float32)])
    maskv = 1.0 - maskx
    gain = jnp.concatenate([g2, g2v, g2v, g2v])
    bias = jnp.concatenate([b2, jnp.zeros((3 * H,), jnp.float32)])
    z_eh = jnp.zeros((EH,), jnp.float32)
    p["vecp"] = jnp.stack([
        jnp.concatenate([bx1.reshape(EH), bv1.reshape(EH)]),
        jnp.concatenate([bx2.reshape(EH), bv2.reshape(EH)]),
        jnp.concatenate([glnx.reshape(EH), gvln.reshape(EH)]),
        jnp.concatenate([blnx.reshape(EH), z_eh]),
        jnp.concatenate([gain, z_eh]),
        jnp.concatenate([bias, z_eh]),
        jnp.concatenate([maskx, z_eh]),
        jnp.concatenate([maskv, z_eh]),
    ], axis=0)

    # routers: GCNConv(H, E) (JAX) and Linear(H*H, E) (gram kernel)
    p["gcn_wt"] = nrm((H, E), 0.1)
    p["gcn_b"] = jnp.zeros((E,), jnp.float32)
    lin_w = nrm((E, H * H), 0.02)
    lin_wtp = _pack_lastdim(lin_w.reshape(E, H, H))              # (H, EH): W_e[i,j] at [i, e*H+j]
    linbig = jnp.zeros((EH, 3 * EH), jnp.float32)
    for k in range(3):
        linbig = linbig.at[(k + 1) * H:(k + 2) * H, k * EH:(k + 1) * EH].set(lin_wtp)
    p["linbig"] = linbig.astype(jnp.bfloat16)
    col = (jnp.arange(3 * EH) // H) % E
    p["ssum3"] = jax.nn.one_hot(col, E, dtype=jnp.float32)       # (3*EH, E) chunk-sum
    p["lin_b"] = jnp.zeros((1, E), jnp.float32)

    # final head: Linear(H, out_dim)
    p["head_wt"] = nrm((H, OUT_DIM), 0.1)
    p["head_b"] = jnp.zeros((OUT_DIM,), jnp.float32)
    return p


# ------------------------------------------------------------------ main
if __name__ == "__main__":
    key = jax.random.PRNGKey(0)
    pkey, xkey, vkey, rkey = jax.random.split(key, 4)

    N = 16            # nodes
    NUM_GRAPHS = 4    # conformer graphs
    NUM_MOLS = 2      # molecules

    params = init_params(pkey)
    x_conf = jax.random.normal(xkey, (N, H), jnp.float32)       # emb_x
    v_conf = jax.random.normal(vkey, (N, 3, H), jnp.float32)    # emb_v

    # simple ring graph (both edge directions)
    idx = jnp.arange(N)
    src = jnp.concatenate([idx, (idx + 1) % N])
    dst = jnp.concatenate([(idx + 1) % N, idx])

    batch = jnp.repeat(jnp.arange(NUM_GRAPHS), N // NUM_GRAPHS)          # node -> graph
    mol_idx = jnp.repeat(jnp.arange(NUM_MOLS), NUM_GRAPHS // NUM_MOLS)   # graph -> mol

    outs, z_loss, x_out, v_out = dssnet_forward(
        params, x_conf, v_conf, src, dst, batch, mol_idx, NUM_GRAPHS, NUM_MOLS, rkey)
    jax.block_until_ready((outs, z_loss, x_out, v_out))

    assert outs.shape == (NUM_MOLS,)
    assert z_loss.shape == (NUM_MOLS,)
    assert x_out.shape == (N, H)
    assert v_out.shape == (N, 3, H)
    assert bool(jnp.all(jnp.isfinite(outs))) and bool(jnp.all(jnp.isfinite(z_loss)))
    assert bool(jnp.all(jnp.isfinite(x_out))) and bool(jnp.all(jnp.isfinite(v_out)))
    print("KERNEL_OK")
</pallas_src>

<mosaic_0001>
module attributes {stable_mosaic.version = 11 : i64} {
  func.func @_router_v_kernel(%arg0: i32, %arg1: memref<8x128xf32, #tpu.memory_space<vmem>>, %arg2: memref<128x384xbf16, #tpu.memory_space<vmem>>, %arg3: memref<128x384xbf16, #tpu.memory_space<vmem>>, %arg4: memref<384x4xf32, #tpu.memory_space<vmem>>, %arg5: memref<1x4xf32, #tpu.memory_space<vmem>>, %arg6: memref<8x4xf32, #tpu.memory_space<vmem>>) attributes {dimension_semantics = [#tpu.dimension_semantics<parallel>], iteration_bounds = array<i64: 2>, scalar_prefetch = 0 : i64, scratch_operands = 0 : i64, tpu.core_type = #tpu.core_type<tc>, window_params = [{transform_indices = @transform_0, window_bounds = array<i64: 8, 128>}, {pipeline_mode = #tpu.pipeline_mode<synchronous>, transform_indices = @transform_1, window_bounds = array<i64: 128, 384>}, {pipeline_mode = #tpu.pipeline_mode<synchronous>, transform_indices = @transform_2, window_bounds = array<i64: 128, 384>}, {pipeline_mode = #tpu.pipeline_mode<synchronous>, transform_indices = @transform_3, window_bounds = array<i64: 384, 4>}, {pipeline_mode = #tpu.pipeline_mode<synchronous>, transform_indices = @transform_4, window_bounds = array<i64: 1, 4>}, {transform_indices = @transform_5, window_bounds = array<i64: 8, 4>}]} {
    %c0 = arith.constant 0 : index
    %c0_0 = arith.constant 0 : index
    %0 = vector.load %arg1[%c0, %c0_0] : memref<8x128xf32, #tpu.memory_space<vmem>>, vector<8x128xf32>
    %1 = arith.truncf %0 : vector<8x128xf32> to vector<8x128xbf16>
    %c0_1 = arith.constant 0 : index
    %c0_2 = arith.constant 0 : index
    %2 = vector.load %arg2[%c0_1, %c0_2] : memref<128x384xbf16, #tpu.memory_space<vmem>>, vector<128x384xbf16>
    %cst = arith.constant dense<0.000000e+00> : vector<8x384xf32>
    %3 = tpu.matmul %1, %2, %cst {dimension_numbers = #tpu.dot_dimension_numbers<[1], [0], [0], [1], [0, 0, 1, 1], [], []>} : vector<8x128xbf16>, vector<128x384xbf16>, vector<8x384xf32> -> vector<8x384xf32>
    %c0_3 = arith.constant 0 : index
    %c0_4 = arith.constant 0 : index
    %4 = vector.load %arg3[%c0_3, %c0_4] : memref<128x384xbf16, #tpu.memory_space<vmem>>, vector<128x384xbf16>
    %cst_5 = arith.constant dense<0.000000e+00> : vector<8x384xf32>
    %5 = tpu.matmul %1, %4, %cst_5 {dimension_numbers = #tpu.dot_dimension_numbers<[1], [0], [0], [1], [0, 0, 1, 1], [], []>} : vector<8x128xbf16>, vector<128x384xbf16>, vector<8x384xf32> -> vector<8x384xf32>
    %6 = arith.mulf %5, %3 : vector<8x384xf32>
    %c0_6 = arith.constant 0 : index
    %c0_7 = arith.constant 0 : index
    %7 = vector.load %arg4[%c0_6, %c0_7] : memref<384x4xf32, #tpu.memory_space<vmem>>, vector<384x4xf32>
    %cst_8 = arith.constant dense<0.000000e+00> : vector<8x4xf32>
    %8 = tpu.matmul %6, %7, %cst_8 {dimension_numbers = #tpu.dot_dimension_numbers<[1], [0], [0], [1], [0, 0, 1, 1], [], []>} : vector<8x384xf32>, vector<384x4xf32>, vector<8x4xf32> -> vector<8x4xf32>
    %c0_9 = arith.constant 0 : index
    %c0_10 = arith.constant 0 : index
    %9 = vector.load %arg5[%c0_9, %c0_10] : memref<1x4xf32, #tpu.memory_space<vmem>>, vector<1x4xf32>
    %10 = vector.broadcast %9 : vector<1x4xf32> to vector<8x4xf32>
    %11 = arith.addf %8, %10 : vector<8x4xf32>
    %c0_11 = arith.constant 0 : index
    %c0_12 = arith.constant 0 : index
    %12 = vector.load %arg6[%c0_11, %c0_12] : memref<8x4xf32, #tpu.memory_space<vmem>>, vector<8x4xf32>
    tpu.vector_store %arg6[%c0_11, %c0_12], %11 {strides = array<i32>} : memref<8x4xf32, #tpu.memory_space<vmem>>, vector<8x4xf32>,
    return
  }
  func.func @transform_0(%arg0: i32) -> (i32, i32) {
    %c0_i32 = arith.constant 0 : i32
    %c0_i32_0 = arith.constant 0 : i32
    return %arg0, %c0_i32 : i32, i32
  }
  func.func @transform_1(%arg0: i32) -> (i32, i32) {
    %c0_i32 = arith.constant 0 : i32
    %c0_i32_0 = arith.constant 0 : i32
    %c0_i32_1 = arith.constant 0 : i32
    return %c0_i32, %c0_i32_0 : i32, i32
  }
  func.func @transform_2(%arg0: i32) -> (i32, i32) {
    %c0_i32 = arith.constant 0 : i32
    %c0_i32_0 = arith.constant 0 : i32
    %c0_i32_1 = arith.constant 0 : i32
    return %c0_i32, %c0_i32_0 : i32, i32
  }
  func.func @transform_3(%arg0: i32) -> (i32, i32) {
    %c0_i32 = arith.constant 0 : i32
    %c0_i32_0 = arith.constant 0 : i32
    %c0_i32_1 = arith.constant 0 : i32
    return %c0_i32, %c0_i32_0 : i32, i32
  }
  func.func @transform_4(%arg0: i32) -> (i32, i32) {
    %c0_i32 = arith.constant 0 : i32
    %c0_i32_0 = arith.constant 0 : i32
    %c0_i32_1 = arith.constant 0 : i32
    return %c0_i32, %c0_i32_0 : i32, i32
  }
  func.func @transform_5(%arg0: i32) -> (i32, i32) {
    %c0_i32 = arith.constant 0 : i32
    %c0_i32_0 = arith.constant 0 : i32
    return %arg0, %c0_i32 : i32, i32
  }
}

</mosaic_0001>

<llo_original>
// kernel: tpu_custom_call.1
$region0: #{tpu_custom_call.1}
  #allocation0 [shape = 'u32[]', space=smem, size = 0x4, offset = 0x4, fixed_abs, tag = 'smem constant byte address 0x4 - core index']
  #allocation1 [shape = 'u32[144,128]{1,0:T(1,128)}', space=vmem, size = 0x12000, scoped, tag = 'internal scratch']
  %s0 = inlined_call_operand.hbm [shape: f32[16,128], index: 0, kind: input, shape index: {}]
  %s1 = inlined_call_operand.vmem [shape: bf16[128,384], index: 1, kind: input, shape index: {}]
  %s2 = inlined_call_operand.vmem [shape: bf16[128,384], index: 2, kind: input, shape index: {}]
  %s3 = inlined_call_operand.vmem [shape: f32[384,4], index: 3, kind: input, shape index: {}]
  %s4 = inlined_call_operand.vmem [shape: f32[1,4], index: 4, kind: input, shape index: {}]
  %s5 = inlined_call_operand.vmem [shape: f32[16,4], index: 5, kind: output, shape index: {}]
  %s6 = sld [smem:[#allocation0]]
  $region57: #{tpu_custom_call.1} parent=0
    _
  %s8 = ssub.s32 1, %s6
  %s9 = scalar_select 0, %s8, %s6
  $region1: #{tpu_custom_call.1} parent=0
    #allocation2 [shape = 'u8[8192]{0}', space=vmem, size = 0x2000, scoped, tag = 'input window, operand 0']
    #allocation3 [shape = 's32[2]{0}', space=sflag, size = 0x8, scoped, tag = 'scoped memory for tpu_custom_call.1']
    %10 = vsyncpa [#allocation3], 0
    %s11 = scalar_lea.sflag [#allocation3], 1
    %12 = vsyncpa %s11, 0
    loop: start=0, step=1, limit=4
    $region2: #{tpu_custom_call.1} parent=1 // loop_pre_header
      _
    $region3: #{tpu_custom_call.1} parent=1 // loop_header
      %s14 = sphi 0, %s18
      %p15 = scmp.ge.s32.totalorder %s14, 4
      %s24 = sphi 0, %s26
      %s27 = sphi 0, %s24
      %s28 = sphi 0, %s27
      %s44 = sphi 0, %s28
      %s48 = sphi 0, %s48
      %s50 = sphi 0, %s48
      %s51 = sphi 0, %s50
      %s65 = sphi 0, %s51
      %s69 = sphi 0, %s69
      %s71 = sphi 0, %s69
      %s72 = sphi 0, %s71
      %s86 = sphi 0, %s72
      %s90 = sphi 0, %s90
      %s92 = sphi 0, %s90
      %s93 = sphi 0, %s92
      %s107 = sphi 0, %s93
      %s111 = sphi 0, %s111
      %s113 = sphi 0, %s111
      %s114 = sphi 0, %s113
      %s128 = sphi 0, %s114
      %s134 = sphi 0, %s136
      %s137 = sphi 0, %s134
      %s138 = sphi 0, %s137
      %s154 = sphi 0, %s138
    $region4: #{tpu_custom_call.1} parent=1 // loop_header_branch
      %17 = sbr.rel (%p15) target = $region8
    $region5: #{tpu_custom_call.1} parent=1 // loop_body
      %s19 = ssub.s32 %s14, 1
      %s20 = ssub.s32 %s14, 2
      %s21 = sadd.s32 %s14, 1
      %s22 = ssub.s32 %s14, %s21
      %p23 = scmp.eq.s32.totalorder %s22, 0
      %s25 = sadd.s32 %s24, 1
      %s26 = scalar_select %p23, %s24, %s25
      %p29 = pneg %p23
      %p30 = scmp.eq.s32.totalorder %s14, 1
      %p31 = por %p29, %p30
      %p32 = scmp.ne.s32.totalorder %s24, %s27
      %p33 = scmp.eq.s32.totalorder %s14, 0
      %p34 = por %p32, %p33
      %p35 = scmp.ne.s32.totalorder %s24, %s27
      %p36 = scmp.eq.s32.totalorder %s19, 1
      %p37 = por %p35, %p36
      %p38 = scmp.ne.s32.totalorder %s27, %s28
      %p39 = scmp.eq.s32.totalorder %s19, 0
      %p40 = por %p38, %p39
      %p41 = scmp.ne.s32.totalorder %s27, %s28
      %p42 = scmp.eq.s32.totalorder %s20, 1
      %p43 = por %p41, %p42
      %p45 = scmp.ne.s32.totalorder %s28, %s44
      %p46 = scmp.eq.s32.totalorder %s20, 0
      %p47 = por %p45, %p46
      %s49 = sadd.s32 %s48, 1
      %p52 = scmp.eq.s32.totalorder %s14, 1
      %p53 = scmp.ne.s32.totalorder %s48, %s50
      %p54 = scmp.eq.s32.totalorder %s14, 0
      %p55 = por %p53, %p54
      %p56 = scmp.ne.s32.totalorder %s48, %s50
      %p57 = scmp.eq.s32.totalorder %s19, 1
      %p58 = por %p56, %p57
      %p59 = scmp.ne.s32.totalorder %s50, %s51
      %p60 = scmp.eq.s32.totalorder %s19, 0
      %p61 = por %p59, %p60
      %p62 = scmp.ne.s32.totalorder %s50, %s51
      %p63 = scmp.eq.s32.totalorder %s20, 1
      %p64 = por %p62, %p63
      %p66 = scmp.ne.s32.totalorder %s51, %s65
      %p67 = scmp.eq.s32.totalorder %s20, 0
      %p68 = por %p66, %p67
      %s70 = sadd.s32 %s69, 1
      %p73 = scmp.eq.s32.totalorder %s14, 1
      %p74 = scmp.ne.s32.totalorder %s69, %s71
      %p75 = scmp.eq.s32.totalorder %s14, 0
      %p76 = por %p74, %p75
      %p77 = scmp.ne.s32.totalorder %s69, %s71
      %p78 = scmp.eq.s32.totalorder %s19, 1
      %p79 = por %p77, %p78
      %p80 = scmp.ne.s32.totalorder %s71, %s72
      %p81 = scmp.eq.s32.totalorder %s19, 0
      %p82 = por %p80, %p81
      %p83 = scmp.ne.s32.totalorder %s71, %s72
      %p84 = scmp.eq.s32.totalorder %s20, 1
      %p85 = por %p83, %p84
      %p87 = scmp.ne.s32.totalorder %s72, %s86
      %p88 = scmp.eq.s32.totalorder %s20, 0
      %p89 = por %p87, %p88
      %s91 = sadd.s32 %s90, 1
      %p94 = scmp.eq.s32.totalorder %s14, 1
      %p95 = scmp.ne.s32.totalorder %s90, %s92
      %p96 = scmp.eq.s32.totalorder %s14, 0
      %p97 = por %p95, %p96
      %p98 = scmp.ne.s32.totalorder %s90, %s92
      %p99 = scmp.eq.s32.totalorder %s19, 1
      %p100 = por %p98, %p99
      %p101 = scmp.ne.s32.totalorder %s92, %s93
      %p102 = scmp.eq.s32.totalorder %s19, 0
      %p103 = por %p101, %p102
      %p104 = scmp.ne.s32.totalorder %s92, %s93
      %p105 = scmp.eq.s32.totalorder %s20, 1
      %p106 = por %p104, %p105
      %p108 = scmp.ne.s32.totalorder %s93, %s107
      %p109 = scmp.eq.s32.totalorder %s20, 0
      %p110 = por %p108, %p109
      %s112 = sadd.s32 %s111, 1
      %p115 = scmp.eq.s32.totalorder %s14, 1
      %p116 = scmp.ne.s32.totalorder %s111, %s113
      %p117 = scmp.eq.s32.totalorder %s14, 0
      %p118 = por %p116, %p117
      %p119 = scmp.ne.s32.totalorder %s111, %s113
      %p120 = scmp.eq.s32.totalorder %s19, 1
      %p121 = por %p119, %p120
      %p122 = scmp.ne.s32.totalorder %s113, %s114
      %p123 = scmp.eq.s32.totalorder %s19, 0
      %p124 = por %p122, %p123
      %p125 = scmp.ne.s32.totalorder %s113, %s114
      %p126 = scmp.eq.s32.totalorder %s20, 1
      %p127 = por %p125, %p126
      %p129 = scmp.ne.s32.totalorder %s114, %s128
      %p130 = scmp.eq.s32.totalorder %s20, 0
      %p131 = por %p129, %p130
      %s132 = ssub.s32 %s14, %s21
      %p133 = scmp.eq.s32.totalorder %s132, 0
      %s135 = sadd.s32 %s134, 1
      %s136 = scalar_select %p133, %s134, %s135
      %p139 = pneg %p133
      %p140 = scmp.eq.s32.totalorder %s14, 1
      %p141 = por %p139, %p140
      %p142 = scmp.ne.s32.totalorder %s134, %s137
      %p143 = scmp.eq.s32.totalorder %s14, 0
      %p144 = por %p142, %p143
      %p145 = scmp.ne.s32.totalorder %s134, %s137
      %p146 = scmp.eq.s32.totalorder %s19, 1
      %p147 = por %p145, %p146
      %p148 = scmp.ne.s32.totalorder %s137, %s138
      %p149 = scmp.eq.s32.totalorder %s19, 0
      %p150 = por %p148, %p149
      %p151 = scmp.ne.s32.totalorder %s137, %s138
      %p152 = scmp.eq.s32.totalorder %s20, 1
      %p153 = por %p151, %p152
      %p155 = scmp.ne.s32.totalorder %s138, %s154
      %p156 = scmp.eq.s32.totalorder %s20, 0
      %p157 = por %p155, %p156
      %p158 = scmp.le.s32.totalorder 1, %s14
      %p159 = scmp.lt.s32.totalorder %s14, 3
      %p160 = pnand %p158, %p159
      %p161 = pneg %p160
      // Predicated region
      $region9: #{tpu_custom_call.1} parent=5 // pred_check
        _
      $region10: #{tpu_custom_call.1} parent=5 // pred_check_branch
        %163 = sbr.rel (%p160) target = $region12
      $region11: #{tpu_custom_call.1} parent=5 // pred_region
        %s164 = ssub.s32 %s14, 1
        // Predicated region
        $region13: #{tpu_custom_call.1} parent=11 // pred_check
          %p165 = pneg %p61
        $region14: #{tpu_custom_call.1} parent=11 // pred_check_branch
          %167 = sbr.rel (%p165) target = $region16
        $region15: #{tpu_custom_call.1} parent=11 // pred_region
          _
        $region16: #{tpu_custom_call.1} parent=11 // pred_fallthru
          _
        // Predicated region
        $region17: #{tpu_custom_call.1} parent=11 // pred_check
          %p168 = pneg %p82
        $region18: #{tpu_custom_call.1} parent=11 // pred_check_branch
          %170 = sbr.rel (%p168) target = $region20
        $region19: #{tpu_custom_call.1} parent=11 // pred_region
          _
        $region20: #{tpu_custom_call.1} parent=11 // pred_fallthru
          _
        // Predicated region
        $region21: #{tpu_custom_call.1} parent=11 // pred_check
          %p171 = pneg %p103
        $region22: #{tpu_custom_call.1} parent=11 // pred_check_branch
          %173 = sbr.rel (%p171) target = $region24
        $region23: #{tpu_custom_call.1} parent=11 // pred_region
          _
        $region24: #{tpu_custom_call.1} parent=11 // pred_fallthru
          _
        // Predicated region
        $region25: #{tpu_custom_call.1} parent=11 // pred_check
          %p174 = pneg %p124
        $region26: #{tpu_custom_call.1} parent=11 // pred_check_branch
          %176 = sbr.rel (%p174) target = $region28
        $region27: #{tpu_custom_call.1} parent=11 // pred_region
          _
        $region28: #{tpu_custom_call.1} parent=11 // pred_fallthru
          _
      $region12: #{tpu_custom_call.1} parent=5 // pred_fallthru
        _
      %p177 = scmp.lt.s32.totalorder %s14, 2
      // Predicated region
      $region29: #{tpu_custom_call.1} parent=5 // pred_check
        %p178 = pneg %p177
      $region30: #{tpu_custom_call.1} parent=5 // pred_check_branch
        %180 = sbr.rel (%p178) target = $region32
      $region31: #{tpu_custom_call.1} parent=5 // pred_region
        // Predicated region
        $region33: #{tpu_custom_call.1} parent=31 // pred_check
          %p181 = pneg %p34
        $region34: #{tpu_custom_call.1} parent=31 // pred_check_branch
          %183 = sbr.rel (%p181) target = $region36
        $region35: #{tpu_custom_call.1} parent=31 // pred_region
          %s184 = sand.u32 %s24, 1
          %s185 = scalar_lea.sflag [#allocation3], %s184
          %s186 = sand.u32 %s24, 1
          %s187 = smul.addr %s186, 8
          %s188 = scalar_lea.vmem [#allocation2], %s187
          %s190 = ssub.s32 128, 128
          %191 = vsyncadd %s185, %s190
          %s192 = smul.addr %s14, 128
          %s193 = scalar_lea.hbm %s0, %s192
          %s195 = sshll.u32 %s188, 4
          %s196 = int_to_ptr.vmem [resolvable:$true] %s195
          %198 = dma.hbm_to_vmem [thread:$0]  %s193, 128, %s196, %s185
        $region36: #{tpu_custom_call.1} parent=31 // pred_fallthru
          _
      $region32: #{tpu_custom_call.1} parent=5 // pred_fallthru
        _
      %p199 = scmp.le.s32.totalorder 1, %s14
      %p200 = scmp.lt.s32.totalorder %s14, 3
      %p201 = pnand %p199, %p200
      %p202 = pneg %p201
      // Predicated region
      $region37: #{tpu_custom_call.1} parent=5 // pred_check
        _
      $region38: #{tpu_custom_call.1} parent=5 // pred_check_branch
        %204 = sbr.rel (%p201) target = $region40
      $region39: #{tpu_custom_call.1} parent=5 // pred_region
        %s205 = ssub.s32 %s14, 1
        %s206 = sand.u32 %s27, 1
        %s207 = scalar_lea.sflag [#allocation3], %s206
        %s208 = sand.u32 %s27, 1
        %s209 = smul.addr %s208, 8
        %s210 = scalar_lea.vmem [#allocation2], %s209
        // Predicated region
        $region41: #{tpu_custom_call.1} parent=39 // pred_check
          %p211 = pneg %p40
        $region42: #{tpu_custom_call.1} parent=39 // pred_check_branch
          %213 = sbr.rel (%p211) target = $region44
        $region43: #{tpu_custom_call.1} parent=39 // pred_region
          %214 = dma.done %s207, 128
        $region44: #{tpu_custom_call.1} parent=39 // pred_fallthru
          _
        %s215 = sand.u32 %s27, 1
        %s216 = scalar_lea.sflag [#allocation3], %s215
        %s217 = sand.u32 %s27, 1
        %s218 = smul.addr %s217, 8
        %s219 = scalar_lea.vmem [#allocation2], %s218
        %p220 = pneg %p40
        %p221 = pneg %p37
        %p222 = pneg %p61
        %p223 = pneg %p58
        %p224 = pneg %p82
        %p225 = pneg %p79
        %p226 = pneg %p103
        %p227 = pneg %p100
        %p228 = pneg %p124
        %p229 = pneg %p121
        %p230 = pneg %p150
        %p231 = pneg %p147
        %p232 = scmp.lt.s32.totalorder %s19, 1
        %s233 = scalar_select %p232, %s19, 1
        %s234 = smul.addr %s233, 8
        %s235 = scalar_lea.vmem %s5, %s234
        %p236 = scmp.lt.s32.totalorder %s19, 1
        %s237 = scalar_select %p236, %s19, 1
        %s238 = smul.addr %s237, 8
        %s239 = scalar_lea.vmem %s5, %s238
        %v241 = vld [vmem:[%s210] sm:$0xff]
        %v242 = vpack.c.bf16 %v241, %v241
        %v243 = vld [vmem:[%s1] sm:$0xff]
        %v244 = vld [vmem:[%s1 + $0x8] sm:$0xf]
        %v245 = vld [vmem:[%s1 + $0xc] sm:$0xff]
        %v246 = vld [vmem:[%s1 + $0x14] sm:$0xf]
        %v247 = vld [vmem:[%s1 + $0x18] sm:$0xff]
        %v248 = vld [vmem:[%s1 + $0x20] sm:$0xf]
        %v249 = vld [vmem:[%s1 + $0x24] sm:$0xff]
        %v250 = vld [vmem:[%s1 + $0x2c] sm:$0xf]
        %v251 = vld [vmem:[%s1 + $0x30] sm:$0xff]
        %v252 = vld [vmem:[%s1 + $0x38] sm:$0xf]
        %v253 = vld [vmem:[%s1 + $0x3c] sm:$0xff]
        %v254 = vld [vmem:[%s1 + $0x44] sm:$0xf]
        %v255 = vld [vmem:[%s1 + $0x48] sm:$0xff]
        %v256 = vld [vmem:[%s1 + $0x50] sm:$0xf]
        %v257 = vld [vmem:[%s1 + $0x54] sm:$0xff]
        %v258 = vld [vmem:[%s1 + $0x5c] sm:$0xf]
        %v259 = vld [vmem:[%s1 + $0x60] sm:$0xff]
        %v260 = vld [vmem:[%s1 + $0x68] sm:$0xf]
        %v261 = vld [vmem:[%s1 + $0x6c] sm:$0xff]
        %v262 = vld [vmem:[%s1 + $0x74] sm:$0xf]
        %v263 = vld [vmem:[%s1 + $0x78] sm:$0xff]
        %v264 = vld [vmem:[%s1 + $0x80] sm:$0xf]
        %v265 = vld [vmem:[%s1 + $0x84] sm:$0xff]
        %v266 = vld [vmem:[%s1 + $0x8c] sm:$0xf]
        %v267 = vld [vmem:[%s1 + $0x90] sm:$0xff]
        %v268 = vld [vmem:[%s1 + $0x98] sm:$0xf]
        %v269 = vld [vmem:[%s1 + $0x9c] sm:$0xff]
        %v270 = vld [vmem:[%s1 + $0xa4] sm:$0xf]
        %v271 = vld [vmem:[%s1 + $0xa8] sm:$0xff]
        %v272 = vld [vmem:[%s1 + $0xb0] sm:$0xf]
        %v273 = vld [vmem:[%s1 + $0xb4] sm:$0xff]
        %v274 = vld [vmem:[%s1 + $0xbc] sm:$0xf]
        %v307 = vunpack.c.l.b16 %v243
        %v308 = vunpack.c.h.b16 %v243
        %v309 = vunpack.c.l.b16 %v244
        %v310 = vunpack.c.l.b16 %v245
        %v311 = vunpack.c.h.b16 %v245
        %v312 = vunpack.c.l.b16 %v246
        %v313 = vunpack.c.l.b16 %v247
        %v314 = vunpack.c.h.b16 %v247
        %v315 = vunpack.c.l.b16 %v248
        %v316 = vunpack.c.l.b16 %v249
        %v317 = vunpack.c.h.b16 %v249
        %v318 = vunpack.c.l.b16 %v250
        %v319 = vunpack.c.l.b16 %v251
        %v320 = vunpack.c.h.b16 %v251
        %v321 = vunpack.c.l.b16 %v252
        %v322 = vunpack.c.l.b16 %v253
        %v323 = vunpack.c.h.b16 %v253
        %v324 = vunpack.c.l.b16 %v254
        %v325 = vunpack.c.l.b16 %v255
        %v326 = vunpack.c.h.b16 %v255
        %v327 = vunpack.c.l.b16 %v256
        %v328 = vunpack.c.l.b16 %v257
        %v329 = vunpack.c.h.b16 %v257
        %v330 = vunpack.c.l.b16 %v258
        %v331 = vunpack.c.l.b16 %v259
        %v332 = vunpack.c.h.b16 %v259
        %v333 = vunpack.c.l.b16 %v260
        %v334 = vunpack.c.l.b16 %v261
        %v335 = vunpack.c.h.b16 %v261
        %v336 = vunpack.c.l.b16 %v262
        %v337 = vunpack.c.l.b16 %v263
        %v338 = vunpack.c.h.b16 %v263
        %v339 = vunpack.c.l.b16 %v264
        %v340 = vunpack.c.l.b16 %v265
        %v341 = vunpack.c.h.b16 %v265
        %v342 = vunpack.c.l.b16 %v266
        %v343 = vunpack.c.l.b16 %v267
        %v344 = vunpack.c.h.b16 %v267
        %v345 = vunpack.c.l.b16 %v268
        %v346 = vunpack.c.l.b16 %v269
        %v347 = vunpack.c.h.b16 %v269
        %v348 = vunpack.c.l.b16 %v270
        %v349 = vunpack.c.l.b16 %v271
        %v350 = vunpack.c.h.b16 %v271
        %v351 = vunpack.c.l.b16 %v272
        %v352 = vunpack.c.l.b16 %v273
        %v353 = vunpack.c.h.b16 %v273
        %v354 = vunpack.c.l.b16 %v274
        %v355 = vpack.c.b16 %v310, %v307
        %v356 = vpack.c.b16 %v311, %v308
        %v357 = vpack.c.b16 %v312, %v309
        %v358 = vpack.c.b16 %v316, %v313
        %v359 = vpack.c.b16 %v317, %v314
        %v360 = vpack.c.b16 %v318, %v315
        %v361 = vpack.c.b16 %v322, %v319
        %v362 = vpack.c.b16 %v323, %v320
        %v363 = vpack.c.b16 %v324, %v321
        %v364 = vpack.c.b16 %v328, %v325
        %v365 = vpack.c.b16 %v329, %v326
        %v366 = vpack.c.b16 %v330, %v327
        %v367 = vpack.c.b16 %v334, %v331
        %v368 = vpack.c.b16 %v335, %v332
        %v369 = vpack.c.b16 %v336, %v333
        %v370 = vpack.c.b16 %v340, %v337
        %v371 = vpack.c.b16 %v341, %v338
        %v372 = vpack.c.b16 %v342, %v339
        %v373 = vpack.c.b16 %v346, %v343
        %v374 = vpack.c.b16 %v347, %v344
        %v375 = vpack.c.b16 %v348, %v345
        %v376 = vpack.c.b16 %v352, %v349
        %v377 = vpack.c.b16 %v353, %v350
        %v378 = vpack.c.b16 %v354, %v351
        %403 = vmatprep.subr.bf16.mxu0 %v356
        %404 = vmatpush1.bf16.msra.mxu0 %v355
        %405 = vmatprep.subr.bf16.mxu0 %v359
        %406 = vmatpush1.bf16.msra.mxu0 %v358
        %407 = vmatprep.subr.bf16.mxu0 %v362
        %408 = vmatpush1.bf16.msra.mxu0 %v361
        %409 = vmatprep.subr.bf16.mxu0 %v365
        %410 = vmatpush1.bf16.msra.mxu0 %v364
        %411 = vmatprep.subr.bf16.mxu0 %v368
        %412 = vmatpush1.bf16.msra.mxu0 %v367
        %413 = vmatprep.subr.bf16.mxu0 %v371
        %414 = vmatpush1.bf16.msra.mxu0 %v370
        %415 = vmatprep.subr.bf16.mxu0 %v374
        %416 = vmatpush1.bf16.msra.mxu0 %v373
        %417 = vmatprep.subr.bf16.mxu0 %v377
        %418 = vmatpush1.bf16.msra.mxu0 %v376
        %419 = vmatprep.subr.bf16.mxu0 0
        %420 = vmatpush1.bf16.msra.mxu0 0
        %421 = vmatprep.subr.bf16.mxu0 0
        %422 = vmatpush1.bf16.msra.mxu0 0
        %423 = vmatprep.subr.bf16.mxu0 0
        %424 = vmatpush1.bf16.msra.mxu0 0
        %425 = vmatprep.subr.bf16.mxu0 0
        %426 = vmatpush1.bf16.msra.mxu0 0
        %427 = vmatprep.subr.bf16.mxu0 0
        %428 = vmatpush1.bf16.msra.mxu0 0
        %429 = vmatprep.subr.bf16.mxu0 0
        %430 = vmatpush1.bf16.msra.mxu0 0
        %431 = vmatprep.subr.bf16.mxu0 0
        %432 = vmatpush1.bf16.msra.mxu0 0
        %433 = vmatprep.subr.bf16.mxu0 0
        %434 = vmatpush1.bf16.msra.mxu0 0
        %435 = vmatprep.mubr.bf16.mxu0 0
        %436 = vmatmul.mubr.bf16.gmra.mrb[0].mxu0 %v242
        %v437 = vpop.f32.mrb[0].mxu0
        %v438 = vadd.f32 0.0, %v437
        %v439 = vpop.f32.mrb[0].mxu0
        %v440 = vadd.f32 0.0, %v439
        %v441 = vpop.f32.mrb[0].mxu0
        %v442 = vpop.f32.mrb[0].mxu0
        %443 = vdwg.mxu0
        %444 = vmatprep.subr.bf16.mxu0 0
        %445 = vmatpush1.bf16.msra.mxu0 %v357
        %446 = vmatprep.subr.bf16.mxu0 0
        %447 = vmatpush1.bf16.msra.mxu0 %v360
        %448 = vmatprep.subr.bf16.mxu0 0
        %449 = vmatpush1.bf16.msra.mxu0 %v363
        %450 = vmatprep.subr.bf16.mxu0 0
        %451 = vmatpush1.bf16.msra.mxu0 %v366
        %452 = vmatprep.subr.bf16.mxu0 0
        %453 = vmatpush1.bf16.msra.mxu0 %v369
        %454 = vmatprep.subr.bf16.mxu0 0
        %455 = vmatpush1.bf16.msra.mxu0 %v372
        %456 = vmatprep.subr.bf16.mxu0 0
        %457 = vmatpush1.bf16.msra.mxu0 %v375
        %458 = vmatprep.subr.bf16.mxu0 0
        %459 = vmatpush1.bf16.msra.mxu0 %v378
        %460 = vmatprep.subr.bf16.mxu0 0
        %461 = vmatpush1.bf16.msra.mxu0 0
        %462 = vmatprep.subr.bf16.mxu0 0
        %463 = vmatpush1.bf16.msra.mxu0 0
        %464 = vmatprep.subr.bf16.mxu0 0
        %465 = vmatpush1.bf16.msra.mxu0 0
        %466 = vmatprep.subr.bf16.mxu0 0
        %467 = vmatpush1.bf16.msra.mxu0 0
        %468 = vmatprep.subr.bf16.mxu0 0
        %469 = vmatpush1.bf16.msra.mxu0 0
        %470 = vmatprep.subr.bf16.mxu0 0
        %471 = vmatpush1.bf16.msra.mxu0 0
        %472 = vmatprep.subr.bf16.mxu0 0
        %473 = vmatpush1.bf16.msra.mxu0 0
        %474 = vmatprep.subr.bf16.mxu0 0
        %475 = vmatpush1.bf16.msra.mxu0 0
        %476 = vmatprep.mubr.bf16.mxu0 0
        %477 = vmatmul.mubr.bf16.gmra.mrb[0].mxu0 %v242
        %v478 = vpop.f32.mrb[0].mxu0
        %v479 = vadd.f32 0.0, %v478
        %v480 = vpop.f32.mrb[0].mxu0
        %v481 = vpop.f32.mrb[0].mxu0
        %v482 = vpop.f32.mrb[0].mxu0
        %483 = vdwg.mxu0
        %v484 = vld [vmem:[%s2] sm:$0xff]
        %v485 = vld [vmem:[%s2 + $0x8] sm:$0xf]
        %v486 = vld [vmem:[%s2 + $0xc] sm:$0xff]
        %v487 = vld [vmem:[%s2 + $0x14] sm:$0xf]
        %v488 = vld [vmem:[%s2 + $0x18] sm:$0xff]
        %v489 = vld [vmem:[%s2 + $0x20] sm:$0xf]
        %v490 = vld [vmem:[%s2 + $0x24] sm:$0xff]
        %v491 = vld [vmem:[%s2 + $0x2c] sm:$0xf]
        %v492 = vld [vmem:[%s2 + $0x30] sm:$0xff]
        %v493 = vld [vmem:[%s2 + $0x38] sm:$0xf]
        %v494 = vld [vmem:[%s2 + $0x3c] sm:$0xff]
        %v495 = vld [vmem:[%s2 + $0x44] sm:$0xf]
        %v496 = vld [vmem:[%s2 + $0x48] sm:$0xff]
        %v497 = vld [vmem:[%s2 + $0x50] sm:$0xf]
        %v498 = vld [vmem:[%s2 + $0x54] sm:$0xff]
        %v499 = vld [vmem:[%s2 + $0x5c] sm:$0xf]
        %v500 = vld [vmem:[%s2 + $0x60] sm:$0xff]
        %v501 = vld [vmem:[%s2 + $0x68] sm:$0xf]
        %v502 = vld [vmem:[%s2 + $0x6c] sm:$0xff]
        %v503 = vld [vmem:[%s2 + $0x74] sm:$0xf]
        %v504 = vld [vmem:[%s2 + $0x78] sm:$0xff]
        %v505 = vld [vmem:[%s2 + $0x80] sm:$0xf]
        %v506 = vld [vmem:[%s2 + $0x84] sm:$0xff]
        %v507 = vld [vmem:[%s2 + $0x8c] sm:$0xf]
        %v508 = vld [vmem:[%s2 + $0x90] sm:$0xff]
        %v509 = vld [vmem:[%s2 + $0x98] sm:$0xf]
        %v510 = vld [vmem:[%s2 + $0x9c] sm:$0xff]
        %v511 = vld [vmem:[%s2 + $0xa4] sm:$0xf]
        %v512 = vld [vmem:[%s2 + $0xa8] sm:$0xff]
        %v513 = vld [vmem:[%s2 + $0xb0] sm:$0xf]
        %v514 = vld [vmem:[%s2 + $0xb4] sm:$0xff]
        %v515 = vld [vmem:[%s2 + $0xbc] sm:$0xf]
        %v548 = vunpack.c.l.b16 %v484
        %v549 = vunpack.c.h.b16 %v484
        %v550 = vunpack.c.l.b16 %v485
        %v551 = vunpack.c.l.b16 %v486
        %v552 = vunpack.c.h.b16 %v486
        %v553 = vunpack.c.l.b16 %v487
        %v554 = vunpack.c.l.b16 %v488
        %v555 = vunpack.c.h.b16 %v488
        %v556 = vunpack.c.l.b16 %v489
        %v557 = vunpack.c.l.b16 %v490
        %v558 = vunpack.c.h.b16 %v490
        %v559 = vunpack.c.l.b16 %v491
        %v560 = vunpack.c.l.b16 %v492
        %v561 = vunpack.c.h.b16 %v492
        %v562 = vunpack.c.l.b16 %v493
        %v563 = vunpack.c.l.b16 %v494
        %v564 = vunpack.c.h.b16 %v494
        %v565 = vunpack.c.l.b16 %v495
        %v566 = vunpack.c.l.b16 %v496
        %v567 = vunpack.c.h.b16 %v496
        %v568 = vunpack.c.l.b16 %v497
        %v569 = vunpack.c.l.b16 %v498
        %v570 = vunpack.c.h.b16 %v498
        %v571 = vunpack.c.l.b16 %v499
        %v572 = vunpack.c.l.b16 %v500
        %v573 = vunpack.c.h.b16 %v500
        %v574 = vunpack.c.l.b16 %v501
        %v575 = vunpack.c.l.b16 %v502
        %v576 = vunpack.c.h.b16 %v502
        %v577 = vunpack.c.l.b16 %v503
        %v578 = vunpack.c.l.b16 %v504
        %v579 = vunpack.c.h.b16 %v504
        %v580 = vunpack.c.l.b16 %v505
        %v581 = vunpack.c.l.b16 %v506
        %v582 = vunpack.c.h.b16 %v506
        %v583 = vunpack.c.l.b16 %v507
        %v584 = vunpack.c.l.b16 %v508
        %v585 = vunpack.c.h.b16 %v508
        %v586 = vunpack.c.l.b16 %v509
        %v587 = vunpack.c.l.b16 %v510
        %v588 = vunpack.c.h.b16 %v510
        %v589 = vunpack.c.l.b16 %v511
        %v590 = vunpack.c.l.b16 %v512
        %v591 = vunpack.c.h.b16 %v512
        %v592 = vunpack.c.l.b16 %v513
        %v593 = vunpack.c.l.b16 %v514
        %v594 = vunpack.c.h.b16 %v514
        %v595 = vunpack.c.l.b16 %v515
        %v596 = vpack.c.b16 %v551, %v548
        %v597 = vpack.c.b16 %v552, %v549
        %v598 = vpack.c.b16 %v553, %v550
        %v599 = vpack.c.b16 %v557, %v554
        %v600 = vpack.c.b16 %v558, %v555
        %v601 = vpack.c.b16 %v559, %v556
        %v602 = vpack.c.b16 %v563, %v560
        %v603 = vpack.c.b16 %v564, %v561
        %v604 = vpack.c.b16 %v565, %v562
        %v605 = vpack.c.b16 %v569, %v566
        %v606 = vpack.c.b16 %v570, %v567
        %v607 = vpack.c.b16 %v571, %v568
        %v608 = vpack.c.b16 %v575, %v572
        %v609 = vpack.c.b16 %v576, %v573
        %v610 = vpack.c.b16 %v577, %v574
        %v611 = vpack.c.b16 %v581, %v578
        %v612 = vpack.c.b16 %v582, %v579
        %v613 = vpack.c.b16 %v583, %v580
        %v614 = vpack.c.b16 %v587, %v584
        %v615 = vpack.c.b16 %v588, %v585
        %v616 = vpack.c.b16 %v589, %v586
        %v617 = vpack.c.b16 %v593, %v590
        %v618 = vpack.c.b16 %v594, %v591
        %v619 = vpack.c.b16 %v595, %v592
        %644 = vmatprep.subr.bf16.mxu0 %v597
        %645 = vmatpush1.bf16.msra.mxu0 %v596
        %646 = vmatprep.subr.bf16.mxu0 %v600
        %647 = vmatpush1.bf16.msra.mxu0 %v599
        %648 = vmatprep.subr.bf16.mxu0 %v603
        %649 = vmatpush1.bf16.msra.mxu0 %v602
        %650 = vmatprep.subr.bf16.mxu0 %v606
        %651 = vmatpush1.bf16.msra.mxu0 %v605
        %652 = vmatprep.subr.bf16.mxu0 %v609
        %653 = vmatpush1.bf16.msra.mxu0 %v608
        %654 = vmatprep.subr.bf16.mxu0 %v612
        %655 = vmatpush1.bf16.msra.mxu0 %v611
        %656 = vmatprep.subr.bf16.mxu0 %v615
        %657 = vmatpush1.bf16.msra.mxu0 %v614
        %658 = vmatprep.subr.bf16.mxu0 %v618
        %659 = vmatpush1.bf16.msra.mxu0 %v617
        %660 = vmatprep.subr.bf16.mxu0 0
        %661 = vmatpush1.bf16.msra.mxu0 0
        %662 = vmatprep.subr.bf16.mxu0 0
        %663 = vmatpush1.bf16.msra.mxu0 0
        %664 = vmatprep.subr.bf16.mxu0 0
        %665 = vmatpush1.bf16.msra.mxu0 0
        %666 = vmatprep.subr.bf16.mxu0 0
        %667 = vmatpush1.bf16.msra.mxu0 0
        %668 = vmatprep.subr.bf16.mxu0 0
        %669 = vmatpush1.bf16.msra.mxu0 0
        %670 = vmatprep.subr.bf16.mxu0 0
        %671 = vmatpush1.bf16.msra.mxu0 0
        %672 = vmatprep.subr.bf16.mxu0 0
        %673 = vmatpush1.bf16.msra.mxu0 0
        %674 = vmatprep.subr.bf16.mxu0 0
        %675 = vmatpush1.bf16.msra.mxu0 0
        %676 = vmatprep.mubr.bf16.mxu0 0
        %677 = vmatmul.mubr.bf16.gmra.mrb[0].mxu0 %v242
        %v678 = vpop.f32.mrb[0].mxu0
        %v679 = vadd.f32 0.0, %v678
        %v680 = vpop.f32.mrb[0].mxu0
        %v681 = vadd.f32 0.0, %v680
        %v682 = vpop.f32.mrb[0].mxu0
        %v683 = vpop.f32.mrb[0].mxu0
        %684 = vdwg.mxu0
        %685 = vmatprep.subr.bf16.mxu0 0
        %686 = vmatpush1.bf16.msra.mxu0 %v598
        %687 = vmatprep.subr.bf16.mxu0 0
        %688 = vmatpush1.bf16.msra.mxu0 %v601
        %689 = vmatprep.subr.bf16.mxu0 0
        %690 = vmatpush1.bf16.msra.mxu0 %v604
        %691 = vmatprep.subr.bf16.mxu0 0
        %692 = vmatpush1.bf16.msra.mxu0 %v607
        %693 = vmatprep.subr.bf16.mxu0 0
        %694 = vmatpush1.bf16.msra.mxu0 %v610
        %695 = vmatprep.subr.bf16.mxu0 0
        %696 = vmatpush1.bf16.msra.mxu0 %v613
        %697 = vmatprep.subr.bf16.mxu0 0
        %698 = vmatpush1.bf16.msra.mxu0 %v616
        %699 = vmatprep.subr.bf16.mxu0 0
        %700 = vmatpush1.bf16.msra.mxu0 %v619
        %701 = vmatprep.subr.bf16.mxu0 0
        %702 = vmatpush1.bf16.msra.mxu0 0
        %703 = vmatprep.subr.bf16.mxu0 0
        %704 = vmatpush1.bf16.msra.mxu0 0
        %705 = vmatprep.subr.bf16.mxu0 0
        %706 = vmatpush1.bf16.msra.mxu0 0
        %707 = vmatprep.subr.bf16.mxu0 0
        %708 = vmatpush1.bf16.msra.mxu0 0
        %709 = vmatprep.subr.bf16.mxu0 0
        %710 = vmatpush1.bf16.msra.mxu0 0
        %711 = vmatprep.subr.bf16.mxu0 0
        %712 = vmatpush1.bf16.msra.mxu0 0
        %713 = vmatprep.subr.bf16.mxu0 0
        %714 = vmatpush1.bf16.msra.mxu0 0
        %715 = vmatprep.subr.bf16.mxu0 0
        %716 = vmatpush1.bf16.msra.mxu0 0
        %717 = vmatprep.mubr.bf16.mxu0 0
        %718 = vmatmul.mubr.bf16.gmra.mrb[0].mxu0 %v242
        %v719 = vpop.f32.mrb[0].mxu0
        %v720 = vadd.f32 0.0, %v719
        %v721 = vpop.f32.mrb[0].mxu0
        %v722 = vpop.f32.mrb[0].mxu0
        %v723 = vpop.f32.mrb[0].mxu0
        %724 = vdwg.mxu0
        %v725 = vmul.f32 %v679, %v438
        %v726 = vmul.f32 %v681, %v440
        %v727 = vmul.f32 %v720, %v479
        %v728 = vld [vmem:[%s3] sm:$0xff]
        %v729 = vld [vmem:[%s3 + $0x8] sm:$0xff]
        %v730 = vld [vmem:[%s3 + $0x10] sm:$0xff]
        %v731 = vld [vmem:[%s3 + $0x18] sm:$0xff]
        %v732 = vld [vmem:[%s3 + $0x20] sm:$0xff]
        %v733 = vld [vmem:[%s3 + $0x28] sm:$0xff]
        %v734 = vld [vmem:[%s3 + $0x30] sm:$0xff]
        %v735 = vld [vmem:[%s3 + $0x38] sm:$0xff]
        %v736 = vld [vmem:[%s3 + $0x40] sm:$0xff]
        %v737 = vld [vmem:[%s3 + $0x48] sm:$0xff]
        %v738 = vld [vmem:[%s3 + $0x50] sm:$0xff]
        %v739 = vld [vmem:[%s3 + $0x58] sm:$0xff]
        %v740 = vld [vmem:[%s3 + $0x60] sm:$0xff]
        %v741 = vld [vmem:[%s3 + $0x68] sm:$0xff]
        %v742 = vld [vmem:[%s3 + $0x70] sm:$0xff]
        %v743 = vld [vmem:[%s3 + $0x78] sm:$0xff]
        %v744 = vld [vmem:[%s3 + $0x80] sm:$0xff]
        %v745 = vld [vmem:[%s3 + $0x88] sm:$0xff]
        %v746 = vld [vmem:[%s3 + $0x90] sm:$0xff]
        %v747 = vld [vmem:[%s3 + $0x98] sm:$0xff]
        %v748 = vld [vmem:[%s3 + $0xa0] sm:$0xff]
        %v749 = vld [vmem:[%s3 + $0xa8] sm:$0xff]
        %v750 = vld [vmem:[%s3 + $0xb0] sm:$0xff]
        %v751 = vld [vmem:[%s3 + $0xb8] sm:$0xff]
        %v752 = vld [vmem:[%s3 + $0xc0] sm:$0xff]
        %v753 = vld [vmem:[%s3 + $0xc8] sm:$0xff]
        %v754 = vld [vmem:[%s3 + $0xd0] sm:$0xff]
        %v755 = vld [vmem:[%s3 + $0xd8] sm:$0xff]
        %v756 = vld [vmem:[%s3 + $0xe0] sm:$0xff]
        %v757 = vld [vmem:[%s3 + $0xe8] sm:$0xff]
        %v758 = vld [vmem:[%s3 + $0xf0] sm:$0xff]
        %v759 = vld [vmem:[%s3 + $0xf8] sm:$0xff]
        %v760 = vld [vmem:[%s3 + $0x100] sm:$0xff]
        %v761 = vld [vmem:[%s3 + $0x108] sm:$0xff]
        %v762 = vld [vmem:[%s3 + $0x110] sm:$0xff]
        %v763 = vld [vmem:[%s3 + $0x118] sm:$0xff]
        %v764 = vld [vmem:[%s3 + $0x120] sm:$0xff]
        %v765 = vld [vmem:[%s3 + $0x128] sm:$0xff]
        %v766 = vld [vmem:[%s3 + $0x130] sm:$0xff]
        %v767 = vld [vmem:[%s3 + $0x138] sm:$0xff]
        %v768 = vld [vmem:[%s3 + $0x140] sm:$0xff]
        %v769 = vld [vmem:[%s3 + $0x148] sm:$0xff]
        %v770 = vld [vmem:[%s3 + $0x150] sm:$0xff]
        %v771 = vld [vmem:[%s3 + $0x158] sm:$0xff]
        %v772 = vld [vmem:[%s3 + $0x160] sm:$0xff]
        %v773 = vld [vmem:[%s3 + $0x168] sm:$0xff]
        %v774 = vld [vmem:[%s3 + $0x170] sm:$0xff]
        %v775 = vld [vmem:[%s3 + $0x178] sm:$0xff]
        %v776 = vld [vmem:[%s4] sm:$0x1]
        %v778 = vlaneseq
        %v779 = vshrl.u32 %v778, 7
        %v780 = vsub.s32 0, %v779
        %v781 = vrot.slane %v776, %v780
        %783 = vmatprep.subr.mxu0 0.0
        %784 = vmatpush1.msra.mxu0 %v728
        %785 = vmatprep.subr.mxu0 0.0
        %786 = vmatpush1.msra.mxu0 %v729
        %787 = vmatprep.subr.mxu0 0.0
        %788 = vmatpush1.msra.mxu0 %v730
        %789 = vmatprep.subr.mxu0 0.0
        %790 = vmatpush1.msra.mxu0 %v731
        %791 = vmatprep.subr.mxu0 0.0
        %792 = vmatpush1.msra.mxu0 %v732
        %793 = vmatprep.subr.mxu0 0.0
        %794 = vmatpush1.msra.mxu0 %v733
        %795 = vmatprep.subr.mxu0 0.0
        %796 = vmatpush1.msra.mxu0 %v734
        %797 = vmatprep.subr.mxu0 0.0
        %798 = vmatpush1.msra.mxu0 %v735
        %799 = vmatprep.subr.mxu0 0.0
        %800 = vmatpush1.msra.mxu0 %v736
        %801 = vmatprep.subr.mxu0 0.0
        %802 = vmatpush1.msra.mxu0 %v737
        %803 = vmatprep.subr.mxu0 0.0
        %804 = vmatpush1.msra.mxu0 %v738
        %805 = vmatprep.subr.mxu0 0.0
        %806 = vmatpush1.msra.mxu0 %v739
        %807 = vmatprep.subr.mxu0 0.0
        %808 = vmatpush1.msra.mxu0 %v740
        %809 = vmatprep.subr.mxu0 0.0
        %810 = vmatpush1.msra.mxu0 %v741
        %811 = vmatprep.subr.mxu0 0.0
        %812 = vmatpush1.msra.mxu0 %v742
        %813 = vmatprep.subr.mxu0 0.0
        %814 = vmatpush1.msra.mxu0 %v743
        %815 = vmatprep.subr.mxu0 0.0
        %816 = vmatpush1.msra.mxu0 %v744
        %817 = vmatprep.subr.mxu0 0.0
        %818 = vmatpush1.msra.mxu0 %v745
        %819 = vmatprep.subr.mxu0 0.0
        %820 = vmatpush1.msra.mxu0 %v746
        %821 = vmatprep.subr.mxu0 0.0
        %822 = vmatpush1.msra.mxu0 %v747
        %823 = vmatprep.subr.mxu0 0.0
        %824 = vmatpush1.msra.mxu0 %v748
        %825 = vmatprep.subr.mxu0 0.0
        %826 = vmatpush1.msra.mxu0 %v749
        %827 = vmatprep.subr.mxu0 0.0
        %828 = vmatpush1.msra.mxu0 %v750
        %829 = vmatprep.subr.mxu0 0.0
        %830 = vmatpush1.msra.mxu0 %v751
        %831 = vmatprep.subr.mxu0 0.0
        %832 = vmatpush1.msra.mxu0 %v752
        %833 = vmatprep.subr.mxu0 0.0
        %834 = vmatpush1.msra.mxu0 %v753
        %835 = vmatprep.subr.mxu0 0.0
        %836 = vmatpush1.msra.mxu0 %v754
        %837 = vmatprep.subr.mxu0 0.0
        %838 = vmatpush1.msra.mxu0 %v755
        %839 = vmatprep.subr.mxu0 0.0
        %840 = vmatpush1.msra.mxu0 %v756
        %841 = vmatprep.subr.mxu0 0.0
        %842 = vmatpush1.msra.mxu0 %v757
        %843 = vmatprep.subr.mxu0 0.0
        %844 = vmatpush1.msra.mxu0 %v758
        %845 = vmatprep.subr.mxu0 0.0
        %846 = vmatpush1.msra.mxu0 %v759
        %847 = vmatprep.mubr.f32.mxu0 %v726
        %848 = vmatmul.mubr.f32.gmra.mrb[0].mxu0 %v725
        %v849 = vpop.f32.mrb[0].mxu0
        %v850 = vadd.f32 %v781, %v849
        %v851 = vpop.f32.mrb[0].mxu0
        %852 = vdwg.mxu0
        %853 = vmatprep.subr.mxu0 0.0
        %854 = vmatpush1.msra.mxu0 %v760
        %855 = vmatprep.subr.mxu0 0.0
        %856 = vmatpush1.msra.mxu0 %v761
        %857 = vmatprep.subr.mxu0 0.0
        %858 = vmatpush1.msra.mxu0 %v762
        %859 = vmatprep.subr.mxu0 0.0
        %860 = vmatpush1.msra.mxu0 %v763
        %861 = vmatprep.subr.mxu0 0.0
        %862 = vmatpush1.msra.mxu0 %v764
        %863 = vmatprep.subr.mxu0 0.0
        %864 = vmatpush1.msra.mxu0 %v765
        %865 = vmatprep.subr.mxu0 0.0
        %866 = vmatpush1.msra.mxu0 %v766
        %867 = vmatprep.subr.mxu0 0.0
        %868 = vmatpush1.msra.mxu0 %v767
        %869 = vmatprep.subr.mxu0 0.0
        %870 = vmatpush1.msra.mxu0 %v768
        %871 = vmatprep.subr.mxu0 0.0
        %872 = vmatpush1.msra.mxu0 %v769
        %873 = vmatprep.subr.mxu0 0.0
        %874 = vmatpush1.msra.mxu0 %v770
        %875 = vmatprep.subr.mxu0 0.0
        %876 = vmatpush1.msra.mxu0 %v771
        %877 = vmatprep.subr.mxu0 0.0
        %878 = vmatpush1.msra.mxu0 %v772
        %879 = vmatprep.subr.mxu0 0.0
        %880 = vmatpush1.msra.mxu0 %v773
        %881 = vmatprep.subr.mxu0 0.0
        %882 = vmatpush1.msra.mxu0 %v774
        %883 = vmatprep.subr.mxu0 0.0
        %884 = vmatpush1.msra.mxu0 %v775
        %885 = vmatprep.subr.mxu0 0.0
        %886 = vmatpush1.msra.mxu0 0.0
        %887 = vmatprep.subr.mxu0 0.0
        %888 = vmatpush1.msra.mxu0 0.0
        %889 = vmatprep.subr.mxu0 0.0
        %890 = vmatpush1.msra.mxu0 0.0
        %891 = vmatprep.subr.mxu0 0.0
        %892 = vmatpush1.msra.mxu0 0.0
        %893 = vmatprep.subr.mxu0 0.0
        %894 = vmatpush1.msra.mxu0 0.0
        %895 = vmatprep.subr.mxu0 0.0
        %896 = vmatpush1.msra.mxu0 0.0
        %897 = vmatprep.subr.mxu0 0.0
        %898 = vmatpush1.msra.mxu0 0.0
        %899 = vmatprep.subr.mxu0 0.0
        %900 = vmatpush1.msra.mxu0 0.0
        %901 = vmatprep.subr.mxu0 0.0
        %902 = vmatpush1.msra.mxu0 0.0
        %903 = vmatprep.subr.mxu0 0.0
        %904 = vmatpush1.msra.mxu0 0.0
        %905 = vmatprep.subr.mxu0 0.0
        %906 = vmatpush1.msra.mxu0 0.0
        %907 = vmatprep.subr.mxu0 0.0
        %908 = vmatpush1.msra.mxu0 0.0
        %909 = vmatprep.subr.mxu0 0.0
        %910 = vmatpush1.msra.mxu0 0.0
        %911 = vmatprep.subr.mxu0 0.0
        %912 = vmatpush1.msra.mxu0 0.0
        %913 = vmatprep.subr.mxu0 0.0
        %914 = vmatpush1.msra.mxu0 0.0
        %915 = vmatprep.subr.mxu0 0.0
        %916 = vmatpush1.msra.mxu0 0.0
        %917 = vmatprep.mubr.f32.mxu0 0.0
        %918 = vmatmul.mubr.f32.gmra.mrb[0].mxu0 %v727
        %v919 = vpop.f32.mrb[0].mxu0
        %v920 = vadd.f32 %v850, %v919
        %v921 = vpop.f32.mrb[0].mxu0
        %922 = vdwg.mxu0
        %vm923 = vcmask 31744
        %924 = vst.msk [vmem:[%s239] sm:$0xff] %vm923, %v920
        %p925 = scmp.lt.s32.totalorder %s19, 1
        %s926 = scalar_select %p925, %s19, 1
        %s927 = smul.addr %s926, 8
        %s928 = scalar_lea.vmem %s5, %s927
        // Predicated region
        $region45: #{tpu_custom_call.1} parent=39 // pred_check
          %p929 = pneg %p147
        $region46: #{tpu_custom_call.1} parent=39 // pred_check_branch
          %931 = sbr.rel (%p929) target = $region48
        $region47: #{tpu_custom_call.1} parent=39 // pred_region
          _
        $region48: #{tpu_custom_call.1} parent=39 // pred_fallthru
          _
      $region40: #{tpu_custom_call.1} parent=5 // pred_fallthru
        _
      %p932 = scmp.le.s32.totalorder 2, %s14
      // Predicated region
      $region49: #{tpu_custom_call.1} parent=5 // pred_check
        %p933 = pneg %p932
      $region50: #{tpu_custom_call.1} parent=5 // pred_check_branch
        %935 = sbr.rel (%p933) target = $region52
      $region51: #{tpu_custom_call.1} parent=5 // pred_region
        %s936 = ssub.s32 %s14, 2
        // Predicated region
        $region53: #{tpu_custom_call.1} parent=51 // pred_check
          %p937 = pneg %p153
        $region54: #{tpu_custom_call.1} parent=51 // pred_check_branch
          %939 = sbr.rel (%p937) target = $region56
        $region55: #{tpu_custom_call.1} parent=51 // pred_region
          %p940 = scmp.lt.s32.totalorder %s20, 1
          %s941 = scalar_select %p940, %s20, 1
          %s942 = smul.addr %s941, 8
          %s943 = scalar_lea.vmem %s5, %s942
        $region56: #{tpu_custom_call.1} parent=51 // pred_fallthru
          _
      $region52: #{tpu_custom_call.1} parent=5 // pred_fallthru
        _
    $region6: #{tpu_custom_call.1} parent=1 // loop_footer
      %s18 = sadd.s32 1, %s14
    $region7: #{tpu_custom_call.1} parent=1 // loop_footer_branch
      %13 = sbr.rel target = $region3
    $region8: #{tpu_custom_call.1} parent=1 // loop_exit
      _
    %944 = vsyncpa [#allocation3], 1
    %s945 = scalar_lea.sflag [#allocation3], 1
    %946 = vsyncpa %s945, 1

</llo_original>
